<compile_context>
chip_gen: v7x
topology: tpu7x:2x2x1
jax: 0.10.0
libtpu: 0.0.40
codegen_flags: <defaults>
</compile_context>

<pallas_src>
import functools

import jax
import jax.numpy as jnp
from jax.experimental import pallas as pl
from jax.experimental.pallas import tpu as pltpu

_EPS = 1e-5


def _round_up(x, m):
    return (x + m - 1) // m * m


def _auto_budget():
    """(vmem_limit_bytes, token_tile_target) derived from the local TPU generation."""
    try:
        vmem_bytes = int(pltpu.get_tpu_info().vmem_capacity_bytes)
    except Exception:                      # attribute / runtime query not available
        vmem_bytes = 64 * 1024 * 1024
    if vmem_bytes >= 100 * 1024 * 1024:    # v5e / v6e: 128 MiB physical VMEM
        return 64 * 1024 * 1024, 512
    return 32 * 1024 * 1024, 256           # v7x: 64 MiB per TensorCore


def _gelu_tanh(x):
    # tanh-approx GELU: transcendental on the (otherwise idle) EUP slot.
    c = 0.7978845608028654                 # sqrt(2/pi)
    return 0.5 * x * (1.0 + jnp.tanh(c * (x + 0.044715 * x * x * x)))


# ----------------------- pass 1: depthwise conv + BN partials -----------------------

def _conv_stats_kernel(x_ref, dww_ref, dwb_ref, y_ref, stats_ref, xp_ref, *, K, pad_l, N):
    # x_ref:     (1, N, C_pad) f32   one batch element, tokens on sublanes
    # dww_ref:   (K, C_pad)    f32   depthwise taps
    # dwb_ref:   (1, C_pad)    f32
    # y_ref:     (1, N, C_pad) bf16  conv output (only a bf16 matmul LHS later)
    # stats_ref: (1, 8, C_pad) f32   row 0 = sum, row 1 = centered sum-of-squares
    # xp_ref:    (N+K-1, C_pad) f32  VMEM scratch holding the zero-padded input
    C_pad = x_ref.shape[-1]
    pad_r = (K - 1) - pad_l

    if pad_l > 0:
        xp_ref[0:pad_l, :] = jnp.zeros((pad_l, C_pad), jnp.float32)
    if pad_r > 0:
        xp_ref[pad_l + N:pad_l + N + pad_r, :] = jnp.zeros((pad_r, C_pad), jnp.float32)
    xp_ref[pad_l:pad_l + N, :] = x_ref[0]

    # K shifted Ref reads (no K materialized copies of a concatenated temp).
    # TODO(synk): for production K (31/51) switch to lax.fori_loop(..., unroll=8) and
    # tile pass 1 over N with a (K-1) halo so long sequences never sit in VMEM whole.
    w = dww_ref[...]
    y = w[0:1, :] * xp_ref[0:N, :]
    for k in range(1, K):
        y = y + w[k:k + 1, :] * xp_ref[k:k + N, :]
    y = y + dwb_ref[...]

    y_ref[0] = y.astype(y_ref.dtype)

    ysum = jnp.sum(y, axis=0, keepdims=True)                 # (1, C_pad)
    yc = y - ysum * (1.0 / N)
    m2 = jnp.sum(yc * yc, axis=0, keepdims=True)             # centered sum of squares
    stats_ref[0] = jnp.concatenate(                          # 8 full sublanes -> unmasked store
        [ysum, m2, jnp.zeros((6, C_pad), jnp.float32)], axis=0)


# -------------------------- pass 2: FFN1 + FFN2 + residual --------------------------

def _ffn_kernel(y_ref, res_ref, w1a_ref, b1a_ref, w2a_ref, b2a_ref,
                w1b_ref, b1b_ref, w2b_ref, b2b_ref, out_ref):
    f32, bf16 = jnp.float32, jnp.bfloat16

    # The BatchNorm affine is already folded into w1a/b1a (glue step); y_ref is bf16.
    h = jnp.dot(y_ref[...], w1a_ref[...], preferred_element_type=f32) + b1a_ref[...]
    h = _gelu_tanh(h)
    z = jnp.dot(h.astype(bf16), w2a_ref[...], preferred_element_type=f32) + b2a_ref[...]

    # ConvFFN2 (groups = D); the (m d)<->(d m) permutation is folded into its weights.
    h = jnp.dot(z.astype(bf16), w1b_ref[...], preferred_element_type=f32) + b1b_ref[...]
    h = _gelu_tanh(h)
    z = jnp.dot(h.astype(bf16), w2b_ref[...], preferred_element_type=f32) + b2b_ref[...]

    out_ref[...] = z + res_ref[...]


def _run_ffn_pass(args, *, grid_steps, Tt, C_pad, rC_pad, T_pad, vmem_limit, weight_buffers):
    def tok(shape):
        return pl.BlockSpec(shape, lambda t: (t, 0))

    def inv(shape):
        nd = len(shape)
        index_map = lambda t, _nd=nd: (0,) * _nd
        if weight_buffers is None:
            return pl.BlockSpec(shape, index_map)
        # Grid-invariant operand: single-buffer it instead of the default double
        # buffering (halves weight VMEM; make-or-break on v7x's 64 MiB per core).
        return pl.BlockSpec(shape, index_map, pipeline_mode=pl.Buffered(weight_buffers))

    return pl.pallas_call(
        _ffn_kernel,
        grid=(grid_steps,),
        in_specs=[
            tok((Tt, C_pad)),                     # bf16 conv output (BN folded into w1a)
            tok((Tt, C_pad)),                     # f32 residual, aliased with the output
            inv((C_pad, rC_pad)), inv((1, rC_pad)),
            inv((rC_pad, C_pad)), inv((1, C_pad)),
            inv((C_pad, rC_pad)), inv((1, rC_pad)),
            inv((rC_pad, C_pad)), inv((1, C_pad)),
        ],
        out_specs=tok((Tt, C_pad)),
        out_shape=jax.ShapeDtypeStruct((T_pad, C_pad), jnp.float32),
        input_output_aliases={1: 0},              # reuse the residual buffer for the output
        compiler_params=pltpu.CompilerParams(
            dimension_semantics=("parallel",),
            vmem_limit_bytes=vmem_limit),
    )(*args)


# ------------------------------------ JAX glue ------------------------------------

def moderntcn_block(x_emb, torch_params, *, M, D, K, r, eps=_EPS, token_tile_target=None):
    """Forward of ModernTCNBlock.  x_emb: (B, M, D, N) float32."""
    B, M_, D_, N = x_emb.shape
    assert (M_, D_) == (M, D)
    C, rD, rM, rC = M * D, r * D, r * M, r * M * D
    p = torch_params

    vmem_limit, auto_tile = _auto_budget()
    if token_tile_target is None:
        token_tile_target = auto_tile

    C_pad = _round_up(C, 128)       # lane-dense channel axis
    rC_pad = _round_up(rC, 128)     # lane-dense hidden axis

    def pad_to(a, shape):
        return jnp.pad(a, [(0, s - d) for s, d in zip(shape, a.shape)])

    # ---- pack PyTorch-shaped params into kernel-friendly matrices ----
    # TODO(synk): for production channel counts, add a per-group grid axis (or pack
    # ~128 channels of groups per matmul) instead of dense block-diagonal matrices,
    # so the MXU never multiplies the zero blocks.
    bd = jax.scipy.linalg.block_diag
    W1a = pad_to(bd(*[p['w1a'][m * rD:(m + 1) * rD, :, 0].T for m in range(M)]),
                 (C_pad, rC_pad)).astype(jnp.float32)        # kept f32 until the BN fold
    W2a = pad_to(bd(*[p['w2a'][m * D:(m + 1) * D, :, 0].T for m in range(M)]),
                 (rC_pad, C_pad)).astype(jnp.bfloat16)
    W1b_f = bd(*[p['w1b'][d * rM:(d + 1) * rM, :, 0].T for d in range(D)])   # (C, rC)
    W2b_f = bd(*[p['w2b'][d * M:(d + 1) * M, :, 0].T for d in range(D)])     # (rC, C)
    perm = jnp.array([(c % D) * M + (c // D) for c in range(C)], jnp.int32)  # m*D+d -> d*M+m
    W1b = pad_to(W1b_f[perm, :], (C_pad, rC_pad)).astype(jnp.bfloat16)
    W2b = pad_to(W2b_f[:, perm], (rC_pad, C_pad)).astype(jnp.bfloat16)
    b1a = pad_to(p['b1a'][None, :], (1, rC_pad)).astype(jnp.float32)
    b2a = pad_to(p['b2a'][None, :], (1, C_pad)).astype(jnp.float32)
    b1b = pad_to(p['b1b'][None, :], (1, rC_pad)).astype(jnp.float32)
    b2b = pad_to(p['b2b'][perm][None, :], (1, C_pad)).astype(jnp.float32)

    dww = pad_to(p['dw_w'][:, 0, :].T, (K, C_pad)).astype(jnp.float32)       # (K, C_pad)
    dwb = pad_to(p['dw_b'][None, :], (1, C_pad)).astype(jnp.float32)

    # Activations in (B, N, C_pad): tokens on sublanes, channels lane-dense.
    # TODO(synk): when blocks are stacked, keep activations persistently in (B, N, C)
    # so this HBM-level transpose and the inverse one after pass 2 disappear (or fold
    # them into the kernels with in-kernel XLU transposes).
    x_nwc = pad_to(x_emb.reshape(B, C, N).transpose(0, 2, 1).astype(jnp.float32),
                   (B, N, C_pad))

    pad_l = (K - 1) // 2

    # -------------- pass 1: depthwise conv + per-batch BN partial stats --------------
    y_conv, stats = pl.pallas_call(
        functools.partial(_conv_stats_kernel, K=K, pad_l=pad_l, N=N),
        grid=(B,),
        in_specs=[
            pl.BlockSpec((1, N, C_pad), lambda b: (b, 0, 0)),
            pl.BlockSpec((K, C_pad), lambda b: (0, 0)),
            pl.BlockSpec((1, C_pad), lambda b: (0, 0)),
        ],
        out_specs=[
            pl.BlockSpec((1, N, C_pad), lambda b: (b, 0, 0)),
            pl.BlockSpec((1, 8, C_pad), lambda b: (b, 0, 0)),
        ],
        out_shape=[
            jax.ShapeDtypeStruct((B, N, C_pad), jnp.bfloat16),   # bf16 writeback
            jax.ShapeDtypeStruct((B, 8, C_pad), jnp.float32),
        ],
        scratch_shapes=[pltpu.VMEM((N + K - 1, C_pad), jnp.float32)],
        compiler_params=pltpu.CompilerParams(
            dimension_semantics=("parallel",),
            vmem_limit_bytes=vmem_limit),
    )(x_nwc, dww, dwb)

    # -------- glue: finalize BN stats (Chan combine) and fold the affine into W1a --------
    cnt_b = float(N)
    cnt = float(B * N)
    sums = stats[:, 0, :]                               # (B, C_pad)
    m2s = stats[:, 1, :]
    mean_b = sums / cnt_b
    mu = jnp.sum(sums, axis=0) / cnt                    # (C_pad,)
    var = (jnp.sum(m2s, axis=0)
           + cnt_b * jnp.sum((mean_b - mu[None, :]) ** 2, axis=0)) / cnt
    var = jnp.maximum(var, 0.0)                         # biased (training-mode) variance
    gamma = pad_to(p['gamma'], (C_pad,)).astype(jnp.float32)
    beta = pad_to(p['beta'], (C_pad,)).astype(jnp.float32)
    scale_v = gamma * jax.lax.rsqrt(var + eps)
    shift_v = beta - mu * scale_v
    b1a = b1a + jnp.dot(shift_v[None, :], W1a)          # (1, rC_pad), f32
    W1a = (scale_v[:, None] * W1a).astype(jnp.bfloat16)

    # ------------------------- pass 2: FFN1 + FFN2 + residual -------------------------
    T = B * N
    tgt = max(8, (token_tile_target // 8) * 8)
    if tgt >= 256:
        tgt = (tgt // 256) * 256                        # fill the 256-wide MXU (v6e/v7x)
    Tt = min(_round_up(T, 8), tgt)
    T_pad = _round_up(T, Tt)
    y2d = pad_to(y_conv.reshape(T, C_pad), (T_pad, C_pad))
    x2d = pad_to(x_nwc.reshape(T, C_pad), (T_pad, C_pad))

    ffn_args = (y2d, x2d, W1a, b1a, W2a, b2a, W1b, b1b, W2b, b2b)
    kw = dict(grid_steps=T_pad // Tt, Tt=Tt, C_pad=C_pad, rC_pad=rC_pad,
              T_pad=T_pad, vmem_limit=vmem_limit)
    try:
        out2d = _run_ffn_pass(ffn_args, weight_buffers=1, **kw)
    except Exception:
        # TODO(synk): drop this fallback once pl.Buffered(1) (single-buffered
        # grid-invariant weights) is confirmed available on the deployed jax/libtpu.
        out2d = _run_ffn_pass(ffn_args, weight_buffers=None, **kw)

    out = out2d[:T].reshape(B, N, C_pad)[:, :, :C].transpose(0, 2, 1)
    return out.reshape(B, M, D, N)


# --------------------------- deterministic parameter init ---------------------------

def init_params(key, M, D, K, r):
    C, rD, rM, rC = M * D, r * D, r * M, r * M * D
    ks = jax.random.split(key, 12)

    def u(k, shape, fan_in):
        b = 1.0 / float(fan_in) ** 0.5
        return jax.random.uniform(k, shape, jnp.float32, -b, b)

    return {
        'dw_w': u(ks[0], (C, 1, K), K), 'dw_b': u(ks[1], (C,), K),
        'gamma': jax.random.uniform(ks[2], (C,), jnp.float32, 0.5, 1.5),
        'beta': jax.random.uniform(ks[3], (C,), jnp.float32, -0.5, 0.5),
        'w1a': u(ks[4], (rC, D, 1), D), 'b1a': u(ks[5], (rC,), D),
        'w2a': u(ks[6], (C, rD, 1), rD), 'b2a': u(ks[7], (C,), rD),
        'w1b': u(ks[8], (rC, M, 1), M), 'b1b': u(ks[9], (rC,), M),
        'w2b': u(ks[10], (C, rM, 1), rM), 'b2b': u(ks[11], (C,), rM),
    }


# ----------------------------- pure-JAX reference check -----------------------------

def _gelu_exact(x):
    return 0.5 * x * (1.0 + jax.scipy.special.erf(x * 0.7071067811865476))


def reference(x_emb, p, *, M, D, K, r, matmul_dtype=jnp.float32,
              approx_gelu=False, conv_out_dtype=jnp.float32):
    """PyTorch-equivalent forward; bf16 / tanh options mirror the kernel's choices."""
    B, _, _, N = x_emb.shape
    C = M * D
    x = x_emb.reshape(B, C, N)
    pad_l = (K - 1) // 2
    pad_r = (K - 1) - pad_l
    xp = jnp.pad(x, ((0, 0), (0, 0), (pad_l, pad_r)))
    y = jnp.zeros_like(x)
    for k in range(K):
        y = y + p['dw_w'][:, 0, k][None, :, None] * xp[:, :, k:k + N]
    y = y + p['dw_b'][None, :, None]
    mu = jnp.mean(y, axis=(0, 2), keepdims=True)
    var = jnp.mean((y - mu) ** 2, axis=(0, 2), keepdims=True)
    y = y.astype(conv_out_dtype).astype(jnp.float32)      # mirrors the bf16 writeback
    y = p['gamma'][None, :, None] * (y - mu) / jnp.sqrt(var + _EPS) + p['beta'][None, :, None]

    gelu = _gelu_tanh if approx_gelu else _gelu_exact

    def gconv(z, w, b, groups):
        Cin, Cout = z.shape[1], w.shape[0]
        zg = z.reshape(B, groups, Cin // groups, N).astype(matmul_dtype)
        wg = w[:, :, 0].reshape(groups, Cout // groups, Cin // groups).astype(matmul_dtype)
        out = jnp.einsum('goc,bgcn->bgon', wg, zg,
                         preferred_element_type=jnp.float32).reshape(B, Cout, N)
        return out + b[None, :, None]

    y = gconv(gelu(gconv(y, p['w1a'], p['b1a'], M)), p['w2a'], p['b2a'], M)
    y = y.reshape(B, M, D, N).transpose(0, 2, 1, 3).reshape(B, C, N)
    y = gconv(gelu(gconv(y, p['w1b'], p['b1b'], D)), p['w2b'], p['b2b'], D)
    y = y.reshape(B, D, M, N).transpose(0, 2, 1, 3)
    return y + x_emb


# --------------------------------------- main ---------------------------------------

if __name__ == "__main__":
    B, M, D, N, K, r = 2, 4, 8, 16, 5, 2
    key = jax.random.PRNGKey(0)
    kx, kp = jax.random.split(key)
    x_emb = jax.random.normal(kx, (B, M, D, N), jnp.float32)
    params = init_params(kp, M, D, K, r)

    out = moderntcn_block(x_emb, params, M=M, D=D, K=K, r=r)
    out = jax.block_until_ready(out)
    assert out.shape == x_emb.shape

    # Check vs a reference mirroring the kernel's bf16 / tanh-GELU choices: catches
    # conv/BN/permutation/layout bugs (those produce O(1) errors).
    ref_b = reference(x_emb, params, M=M, D=D, K=K, r=r,
                      matmul_dtype=jnp.bfloat16, approx_gelu=True,
                      conv_out_dtype=jnp.bfloat16)
    err_b = float(jnp.max(jnp.abs(out - ref_b)))
    assert err_b < 7e-2, f"mismatch vs mirrored bf16 reference: {err_b}"

    # Loose check vs the exact-GELU, full-f32 reference: bounds quantization drift.
    ref_f = reference(x_emb, params, M=M, D=D, K=K, r=r)
    err_f = float(jnp.max(jnp.abs(out - ref_f)))
    assert err_f < 2.5e-1, f"bf16/tanh deviation too large vs f32 reference: {err_f}"

    print("KERNEL_OK")
</pallas_src>

<mosaic_0001>
module attributes {stable_mosaic.version = 11 : i64} {
  func.func @_conv_stats_kernel(%arg0: i32, %arg1: memref<1x16x128xf32, #tpu.memory_space<vmem>>, %arg2: memref<5x128xf32, #tpu.memory_space<vmem>>, %arg3: memref<1x128xf32, #tpu.memory_space<vmem>>, %arg4: memref<1x16x128xbf16, #tpu.memory_space<vmem>>, %arg5: memref<1x8x128xf32, #tpu.memory_space<vmem>>, %arg6: memref<20x128xf32, #tpu.memory_space<vmem>>) attributes {dimension_semantics = [#tpu.dimension_semantics<parallel>], iteration_bounds = array<i64: 2>, scalar_prefetch = 0 : i64, scratch_operands = 1 : i64, tpu.core_type = #tpu.core_type<tc>, window_params = [{transform_indices = @transform_0, window_bounds = array<i64: 1, 16, 128>}, {pipeline_mode = #tpu.pipeline_mode<synchronous>, transform_indices = @transform_1, window_bounds = array<i64: 5, 128>}, {pipeline_mode = #tpu.pipeline_mode<synchronous>, transform_indices = @transform_2, window_bounds = array<i64: 1, 128>}, {transform_indices = @transform_3, window_bounds = array<i64: 1, 16, 128>}, {transform_indices = @transform_4, window_bounds = array<i64: 1, 8, 128>}]} {
    %cst = arith.constant 0.000000e+00 : f32
    %0 = vector.broadcast %cst : f32 to vector<2x128xf32>
    %c0 = arith.constant 0 : index
    %c0_0 = arith.constant 0 : index
    %1 = vector.load %arg6[%c0, %c0_0] : memref<20x128xf32, #tpu.memory_space<vmem>>, vector<2x128xf32>
    tpu.vector_store %arg6[%c0, %c0_0], %0 {strides = array<i32>} : memref<20x128xf32, #tpu.memory_space<vmem>>, vector<2x128xf32>,
    %cst_1 = arith.constant 0.000000e+00 : f32
    %2 = vector.broadcast %cst_1 : f32 to vector<2x128xf32>
    %c18 = arith.constant 18 : index
    %c0_2 = arith.constant 0 : index
    %3 = vector.load %arg6[%c18, %c0_2] : memref<20x128xf32, #tpu.memory_space<vmem>>, vector<2x128xf32>
    tpu.vector_store %arg6[%c18, %c0_2], %2 {strides = array<i32>} : memref<20x128xf32, #tpu.memory_space<vmem>>, vector<2x128xf32>,
    %c0_3 = arith.constant 0 : index
    %c0_4 = arith.constant 0 : index
    %c0_5 = arith.constant 0 : index
    %4 = vector.load %arg1[%c0_3, %c0_4, %c0_5] : memref<1x16x128xf32, #tpu.memory_space<vmem>>, vector<1x16x128xf32>
    %5 = vector.shape_cast %4 : vector<1x16x128xf32> to vector<16x128xf32>
    %c2 = arith.constant 2 : index
    %c0_6 = arith.constant 0 : index
    %6 = vector.load %arg6[%c2, %c0_6] : memref<20x128xf32, #tpu.memory_space<vmem>>, vector<16x128xf32>
    tpu.vector_store %arg6[%c2, %c0_6], %5 {strides = array<i32>} : memref<20x128xf32, #tpu.memory_space<vmem>>, vector<16x128xf32>,
    %c0_7 = arith.constant 0 : index
    %c0_8 = arith.constant 0 : index
    %7 = vector.load %arg2[%c0_7, %c0_8] : memref<5x128xf32, #tpu.memory_space<vmem>>, vector<5x128xf32>
    %8 = vector.extract_strided_slice %7 {offsets = [0, 0], sizes = [1, 128], strides = [1, 1]} : vector<5x128xf32> to vector<1x128xf32>
    %c0_9 = arith.constant 0 : index
    %c0_10 = arith.constant 0 : index
    %9 = vector.load %arg6[%c0_9, %c0_10] : memref<20x128xf32, #tpu.memory_space<vmem>>, vector<16x128xf32>
    %10 = vector.broadcast %8 : vector<1x128xf32> to vector<16x128xf32>
    %11 = arith.mulf %10, %9 : vector<16x128xf32>
    %12 = vector.extract_strided_slice %7 {offsets = [1, 0], sizes = [1, 128], strides = [1, 1]} : vector<5x128xf32> to vector<1x128xf32>
    %c1 = arith.constant 1 : index
    %c0_11 = arith.constant 0 : index
    %13 = vector.load %arg6[%c1, %c0_11] : memref<20x128xf32, #tpu.memory_space<vmem>>, vector<16x128xf32>
    %14 = vector.broadcast %12 : vector<1x128xf32> to vector<16x128xf32>
    %15 = arith.mulf %14, %13 : vector<16x128xf32>
    %16 = arith.addf %11, %15 : vector<16x128xf32>
    %17 = vector.extract_strided_slice %7 {offsets = [2, 0], sizes = [1, 128], strides = [1, 1]} : vector<5x128xf32> to vector<1x128xf32>
    %c2_12 = arith.constant 2 : index
    %c0_13 = arith.constant 0 : index
    %18 = vector.load %arg6[%c2_12, %c0_13] : memref<20x128xf32, #tpu.memory_space<vmem>>, vector<16x128xf32>
    %19 = vector.broadcast %17 : vector<1x128xf32> to vector<16x128xf32>
    %20 = arith.mulf %19, %18 : vector<16x128xf32>
    %21 = arith.addf %16, %20 : vector<16x128xf32>
    %22 = vector.extract_strided_slice %7 {offsets = [3, 0], sizes = [1, 128], strides = [1, 1]} : vector<5x128xf32> to vector<1x128xf32>
    %c3 = arith.constant 3 : index
    %c0_14 = arith.constant 0 : index
    %23 = vector.load %arg6[%c3, %c0_14] : memref<20x128xf32, #tpu.memory_space<vmem>>, vector<16x128xf32>
    %24 = vector.broadcast %22 : vector<1x128xf32> to vector<16x128xf32>
    %25 = arith.mulf %24, %23 : vector<16x128xf32>
    %26 = arith.addf %21, %25 : vector<16x128xf32>
    %27 = vector.extract_strided_slice %7 {offsets = [4, 0], sizes = [1, 128], strides = [1, 1]} : vector<5x128xf32> to vector<1x128xf32>
    %c4 = arith.constant 4 : index
    %c0_15 = arith.constant 0 : index
    %28 = vector.load %arg6[%c4, %c0_15] : memref<20x128xf32, #tpu.memory_space<vmem>>, vector<16x128xf32>
    %29 = vector.broadcast %27 : vector<1x128xf32> to vector<16x128xf32>
    %30 = arith.mulf %29, %28 : vector<16x128xf32>
    %31 = arith.addf %26, %30 : vector<16x128xf32>
    %c0_16 = arith.constant 0 : index
    %c0_17 = arith.constant 0 : index
    %32 = vector.load %arg3[%c0_16, %c0_17] : memref<1x128xf32, #tpu.memory_space<vmem>>, vector<1x128xf32>
    %33 = vector.broadcast %32 : vector<1x128xf32> to vector<16x128xf32>
    %34 = arith.addf %31, %33 : vector<16x128xf32>
    %35 = arith.truncf %34 : vector<16x128xf32> to vector<16x128xbf16>
    %c0_18 = arith.constant 0 : index
    %c0_19 = arith.constant 0 : index
    %c0_20 = arith.constant 0 : index
    %36 = vector.load %arg4[%c0_18, %c0_19, %c0_20] : memref<1x16x128xbf16, #tpu.memory_space<vmem>>, vector<1x16x128xbf16>
    %37 = vector.shape_cast %36 : vector<1x16x128xbf16> to vector<16x128xbf16>
    %38 = vector.shape_cast %35 : vector<16x128xbf16> to vector<1x16x128xbf16>
    tpu.vector_store %arg4[%c0_18, %c0_19, %c0_20], %38 {strides = array<i32>} : memref<1x16x128xbf16, #tpu.memory_space<vmem>>, vector<1x16x128xbf16>,
    %cst_21 = arith.constant dense<0.000000e+00> : vector<128xf32>
    %39 = vector.multi_reduction <add>, %34, %cst_21 [0] : vector<16x128xf32> to vector<128xf32>
    %40 = vector.shape_cast %39 : vector<128xf32> to vector<1x128xf32>
    %cst_22 = arith.constant 6.250000e-02 : f32
    %41 = vector.broadcast %cst_22 : f32 to vector<1x128xf32>
    %42 = arith.mulf %40, %41 : vector<1x128xf32>
    %43 = vector.broadcast %42 : vector<1x128xf32> to vector<16x128xf32>
    %44 = arith.subf %34, %43 : vector<16x128xf32>
    %45 = arith.mulf %44, %44 : vector<16x128xf32>
    %cst_23 = arith.constant dense<0.000000e+00> : vector<128xf32>
    %46 = vector.multi_reduction <add>, %45, %cst_23 [0] : vector<16x128xf32> to vector<128xf32>
    %47 = vector.shape_cast %46 : vector<128xf32> to vector<1x128xf32>
    %cst_24 = arith.constant 0.000000e+00 : f32
    %48 = vector.broadcast %cst_24 : f32 to vector<6x128xf32>
    %49 = tpu.concatenate %40, %47, %48 in 0 : vector<1x128xf32>, vector<1x128xf32>, vector<6x128xf32> -> vector<8x128xf32>
    %c0_25 = arith.constant 0 : index
    %c0_26 = arith.constant 0 : index
    %c0_27 = arith.constant 0 : index
    %50 = vector.load %arg5[%c0_25, %c0_26, %c0_27] : memref<1x8x128xf32, #tpu.memory_space<vmem>>, vector<1x8x128xf32>
    %51 = vector.shape_cast %50 : vector<1x8x128xf32> to vector<8x128xf32>
    %52 = vector.shape_cast %49 : vector<8x128xf32> to vector<1x8x128xf32>
    tpu.vector_store %arg5[%c0_25, %c0_26, %c0_27], %52 {strides = array<i32>} : memref<1x8x128xf32, #tpu.memory_space<vmem>>, vector<1x8x128xf32>,
    return
  }
  func.func @transform_0(%arg0: i32) -> (i32, i32, i32) {
    %c0_i32 = arith.constant 0 : i32
    %c0_i32_0 = arith.constant 0 : i32
    %c0_i32_1 = arith.constant 0 : i32
    return %arg0, %c0_i32, %c0_i32_0 : i32, i32, i32
  }
  func.func @transform_1(%arg0: i32) -> (i32, i32) {
    %c0_i32 = arith.constant 0 : i32
    %c0_i32_0 = arith.constant 0 : i32
    %c0_i32_1 = arith.constant 0 : i32
    return %c0_i32, %c0_i32_0 : i32, i32
  }
  func.func @transform_2(%arg0: i32) -> (i32, i32) {
    %c0_i32 = arith.constant 0 : i32
    %c0_i32_0 = arith.constant 0 : i32
    %c0_i32_1 = arith.constant 0 : i32
    return %c0_i32, %c0_i32_0 : i32, i32
  }
  func.func @transform_3(%arg0: i32) -> (i32, i32, i32) {
    %c0_i32 = arith.constant 0 : i32
    %c0_i32_0 = arith.constant 0 : i32
    %c0_i32_1 = arith.constant 0 : i32
    return %arg0, %c0_i32, %c0_i32_0 : i32, i32, i32
  }
  func.func @transform_4(%arg0: i32) -> (i32, i32, i32) {
    %c0_i32 = arith.constant 0 : i32
    %c0_i32_0 = arith.constant 0 : i32
    %c0_i32_1 = arith.constant 0 : i32
    return %arg0, %c0_i32, %c0_i32_0 : i32, i32, i32
  }
}

</mosaic_0001>

<llo_original>
// kernel: tpu_custom_call.1
$region0: #{tpu_custom_call.1}
  #allocation0 [shape = 'u32[]', space=smem, size = 0x4, offset = 0x4, fixed_abs, tag = 'smem constant byte address 0x4 - core index']
  #allocation1 [shape = 'u32[144,128]{1,0:T(1,128)}', space=vmem, size = 0x12000, scoped, tag = 'internal scratch']
  #allocation2 [shape = 'f32[20,128]{1,0:T(8,128)}', space=vmem, size = 0x3000, scoped, tag = 'scratch operand']
  %s0 = inlined_call_operand.hbm [shape: f32[2,16,128], index: 0, kind: input, shape index: {}]
  %s1 = inlined_call_operand.hbm [shape: f32[5,128], index: 1, kind: input, shape index: {}]
  %s2 = inlined_call_operand.vmem [shape: f32[1,128], index: 2, kind: input, shape index: {}]
  %s3 = inlined_call_operand.hbm [shape: bf16[2,16,128], index: 3, kind: output, shape index: {0}]
  %s4 = inlined_call_operand.hbm [shape: f32[2,8,128], index: 4, kind: output, shape index: {1}]
  %5 = xla_tuple %s3, %s4
  %s6 = sld [smem:[#allocation0]]
  $region61: #{tpu_custom_call.1} parent=0
    _
  %s8 = ssub.s32 1, %s6
  %s9 = scalar_select 0, %s8, %s6
  $region1: #{tpu_custom_call.1} parent=0
    #allocation3 [shape = 'u8[16384]{0}', space=vmem, size = 0x4000, scoped, tag = 'input window, operand 0']
    #allocation4 [shape = 's32[2]{0}', space=sflag, size = 0x8, scoped, tag = 'scoped memory for tpu_custom_call.1']
    #allocation5 [shape = 's32[2]{0}', space=sflag, size = 0x8, scoped, tag = 'scoped memory for tpu_custom_call.1']
    #allocation6 [shape = 'u8[4096]{0}', space=vmem, size = 0x1000, scoped, tag = 'input window, operand 1, single buffered']
    #allocation7 [shape = 's32[1]{0}', space=sflag, size = 0x4, scoped, tag = 'scoped memory for tpu_custom_call.1']
    #allocation8 [shape = 'u8[8192]{0}', space=vmem, size = 0x2000, scoped, tag = 'output window, operand 0']
    #allocation9 [shape = 'u8[8192]{0}', space=vmem, size = 0x2000, scoped, tag = 'output window, operand 1']
    #allocation10 [shape = 's32[2]{0}', space=sflag, size = 0x8, scoped, tag = 'scoped memory for tpu_custom_call.1']
    %10 = vsyncpa [#allocation4], 0
    %s11 = scalar_lea.sflag [#allocation4], 1
    %12 = vsyncpa %s11, 0
    %13 = vsyncpa [#allocation7], 0
    %14 = vsyncpa [#allocation5], 0
    %s15 = scalar_lea.sflag [#allocation5], 1
    %16 = vsyncpa %s15, 0
    %17 = vsyncpa [#allocation10], 0
    %s18 = scalar_lea.sflag [#allocation10], 1
    %19 = vsyncpa %s18, 0
    loop: start=0, step=1, limit=4
    $region2: #{tpu_custom_call.1} parent=1 // loop_pre_header
      _
    $region3: #{tpu_custom_call.1} parent=1 // loop_header
      %s21 = sphi 0, %s25
      %p22 = scmp.ge.s32.totalorder %s21, 4
      %s31 = sphi 0, %s33
      %s34 = sphi 0, %s31
      %s35 = sphi 0, %s34
      %s51 = sphi 0, %s35
      %s55 = sphi 0, %s55
      %s57 = sphi 0, %s55
      %s58 = sphi 0, %s57
      %s72 = sphi 0, %s58
      %s76 = sphi 0, %s76
      %s78 = sphi 0, %s76
      %s79 = sphi 0, %s78
      %s93 = sphi 0, %s79
      %s99 = sphi 0, %s101
      %s102 = sphi 0, %s99
      %s103 = sphi 0, %s102
      %s119 = sphi 0, %s103
      %s125 = sphi 0, %s127
      %s128 = sphi 0, %s125
      %s129 = sphi 0, %s128
      %s145 = sphi 0, %s129
    $region4: #{tpu_custom_call.1} parent=1 // loop_header_branch
      %24 = sbr.rel (%p22) target = $region8
    $region5: #{tpu_custom_call.1} parent=1 // loop_body
      %s26 = ssub.s32 %s21, 1
      %s27 = ssub.s32 %s21, 2
      %s28 = sadd.s32 %s21, 1
      %s29 = ssub.s32 %s21, %s28
      %p30 = scmp.eq.s32.totalorder %s29, 0
      %s32 = sadd.s32 %s31, 1
      %s33 = scalar_select %p30, %s31, %s32
      %p36 = pneg %p30
      %p37 = scmp.eq.s32.totalorder %s21, 1
      %p38 = por %p36, %p37
      %p39 = scmp.ne.s32.totalorder %s31, %s34
      %p40 = scmp.eq.s32.totalorder %s21, 0
      %p41 = por %p39, %p40
      %p42 = scmp.ne.s32.totalorder %s31, %s34
      %p43 = scmp.eq.s32.totalorder %s26, 1
      %p44 = por %p42, %p43
      %p45 = scmp.ne.s32.totalorder %s34, %s35
      %p46 = scmp.eq.s32.totalorder %s26, 0
      %p47 = por %p45, %p46
      %p48 = scmp.ne.s32.totalorder %s34, %s35
      %p49 = scmp.eq.s32.totalorder %s27, 1
      %p50 = por %p48, %p49
      %p52 = scmp.ne.s32.totalorder %s35, %s51
      %p53 = scmp.eq.s32.totalorder %s27, 0
      %p54 = por %p52, %p53
      %s56 = sadd.s32 %s55, 1
      %p59 = scmp.eq.s32.totalorder %s21, 1
      %p60 = scmp.ne.s32.totalorder %s55, %s57
      %p61 = scmp.eq.s32.totalorder %s21, 0
      %p62 = por %p60, %p61
      %p63 = scmp.ne.s32.totalorder %s55, %s57
      %p64 = scmp.eq.s32.totalorder %s26, 1
      %p65 = por %p63, %p64
      %p66 = scmp.ne.s32.totalorder %s57, %s58
      %p67 = scmp.eq.s32.totalorder %s26, 0
      %p68 = por %p66, %p67
      %p69 = scmp.ne.s32.totalorder %s57, %s58
      %p70 = scmp.eq.s32.totalorder %s27, 1
      %p71 = por %p69, %p70
      %p73 = scmp.ne.s32.totalorder %s58, %s72
      %p74 = scmp.eq.s32.totalorder %s27, 0
      %p75 = por %p73, %p74
      %s77 = sadd.s32 %s76, 1
      %p80 = scmp.eq.s32.totalorder %s21, 1
      %p81 = scmp.ne.s32.totalorder %s76, %s78
      %p82 = scmp.eq.s32.totalorder %s21, 0
      %p83 = por %p81, %p82
      %p84 = scmp.ne.s32.totalorder %s76, %s78
      %p85 = scmp.eq.s32.totalorder %s26, 1
      %p86 = por %p84, %p85
      %p87 = scmp.ne.s32.totalorder %s78, %s79
      %p88 = scmp.eq.s32.totalorder %s26, 0
      %p89 = por %p87, %p88
      %p90 = scmp.ne.s32.totalorder %s78, %s79
      %p91 = scmp.eq.s32.totalorder %s27, 1
      %p92 = por %p90, %p91
      %p94 = scmp.ne.s32.totalorder %s79, %s93
      %p95 = scmp.eq.s32.totalorder %s27, 0
      %p96 = por %p94, %p95
      %s97 = ssub.s32 %s21, %s28
      %p98 = scmp.eq.s32.totalorder %s97, 0
      %s100 = sadd.s32 %s99, 1
      %s101 = scalar_select %p98, %s99, %s100
      %p104 = pneg %p98
      %p105 = scmp.eq.s32.totalorder %s21, 1
      %p106 = por %p104, %p105
      %p107 = scmp.ne.s32.totalorder %s99, %s102
      %p108 = scmp.eq.s32.totalorder %s21, 0
      %p109 = por %p107, %p108
      %p110 = scmp.ne.s32.totalorder %s99, %s102
      %p111 = scmp.eq.s32.totalorder %s26, 1
      %p112 = por %p110, %p111
      %p113 = scmp.ne.s32.totalorder %s102, %s103
      %p114 = scmp.eq.s32.totalorder %s26, 0
      %p115 = por %p113, %p114
      %p116 = scmp.ne.s32.totalorder %s102, %s103
      %p117 = scmp.eq.s32.totalorder %s27, 1
      %p118 = por %p116, %p117
      %p120 = scmp.ne.s32.totalorder %s103, %s119
      %p121 = scmp.eq.s32.totalorder %s27, 0
      %p122 = por %p120, %p121
      %s123 = ssub.s32 %s21, %s28
      %p124 = scmp.eq.s32.totalorder %s123, 0
      %s126 = sadd.s32 %s125, 1
      %s127 = scalar_select %p124, %s125, %s126
      %p130 = pneg %p124
      %p131 = scmp.eq.s32.totalorder %s21, 1
      %p132 = por %p130, %p131
      %p133 = scmp.ne.s32.totalorder %s125, %s128
      %p134 = scmp.eq.s32.totalorder %s21, 0
      %p135 = por %p133, %p134
      %p136 = scmp.ne.s32.totalorder %s125, %s128
      %p137 = scmp.eq.s32.totalorder %s26, 1
      %p138 = por %p136, %p137
      %p139 = scmp.ne.s32.totalorder %s128, %s129
      %p140 = scmp.eq.s32.totalorder %s26, 0
      %p141 = por %p139, %p140
      %p142 = scmp.ne.s32.totalorder %s128, %s129
      %p143 = scmp.eq.s32.totalorder %s27, 1
      %p144 = por %p142, %p143
      %p146 = scmp.ne.s32.totalorder %s129, %s145
      %p147 = scmp.eq.s32.totalorder %s27, 0
      %p148 = por %p146, %p147
      %p149 = scmp.le.s32.totalorder 1, %s21
      %p150 = scmp.lt.s32.totalorder %s21, 3
      %p151 = pnand %p149, %p150
      %p152 = pneg %p151
      // Predicated region
      $region9: #{tpu_custom_call.1} parent=5 // pred_check
        _
      $region10: #{tpu_custom_call.1} parent=5 // pred_check_branch
        %154 = sbr.rel (%p151) target = $region12
      $region11: #{tpu_custom_call.1} parent=5 // pred_region
        %s155 = ssub.s32 %s21, 1
        // Predicated region
        $region13: #{tpu_custom_call.1} parent=11 // pred_check
          %p156 = pneg %p68
        $region14: #{tpu_custom_call.1} parent=11 // pred_check_branch
          %158 = sbr.rel (%p156) target = $region16
        $region15: #{tpu_custom_call.1} parent=11 // pred_region
          %s160 = ssub.s32 128, 128
          %161 = vsyncadd [#allocation7], %s160
          %s163 = sshll.u32 [#allocation6], 4
          %s164 = int_to_ptr.vmem [resolvable:$true] %s163
          %166 = dma.hbm_to_vmem [thread:$0]  %s1, 128, %s164, [#allocation7]
        $region16: #{tpu_custom_call.1} parent=11 // pred_fallthru
          _
        // Predicated region
        $region17: #{tpu_custom_call.1} parent=11 // pred_check
          %p167 = pneg %p89
        $region18: #{tpu_custom_call.1} parent=11 // pred_check_branch
          %169 = sbr.rel (%p167) target = $region20
        $region19: #{tpu_custom_call.1} parent=11 // pred_region
          _
        $region20: #{tpu_custom_call.1} parent=11 // pred_fallthru
          _
      $region12: #{tpu_custom_call.1} parent=5 // pred_fallthru
        _
      %p170 = scmp.lt.s32.totalorder %s21, 2
      // Predicated region
      $region21: #{tpu_custom_call.1} parent=5 // pred_check
        %p171 = pneg %p170
      $region22: #{tpu_custom_call.1} parent=5 // pred_check_branch
        %173 = sbr.rel (%p171) target = $region24
      $region23: #{tpu_custom_call.1} parent=5 // pred_region
        // Predicated region
        $region25: #{tpu_custom_call.1} parent=23 // pred_check
          %p174 = pneg %p41
        $region26: #{tpu_custom_call.1} parent=23 // pred_check_branch
          %176 = sbr.rel (%p174) target = $region28
        $region27: #{tpu_custom_call.1} parent=23 // pred_region
          %s177 = sand.u32 %s31, 1
          %s178 = scalar_lea.sflag [#allocation4], %s177
          %s179 = sand.u32 %s31, 1
          %s180 = smul.addr %s179, 16
          %s181 = scalar_lea.vmem [#allocation3], %s180
          %s183 = ssub.s32 256, 256
          %184 = vsyncadd %s178, %s183
          %s185 = smul.addr %s21, 2
          %s186 = smul.addr %s185, 128
          %s187 = scalar_lea.hbm %s0, %s186
          %s188 = sshll.u32 %s181, 4
          %s189 = int_to_ptr.vmem [resolvable:$true] %s188
          %194 = dma.hbm_to_vmem [thread:$0]  %s187, 256, %s189, %s178, 128, 128, 8
        $region28: #{tpu_custom_call.1} parent=23 // pred_fallthru
          _
      $region24: #{tpu_custom_call.1} parent=5 // pred_fallthru
        _
      %p195 = scmp.le.s32.totalorder 1, %s21
      %p196 = scmp.lt.s32.totalorder %s21, 3
      %p197 = pnand %p195, %p196
      %p198 = pneg %p197
      // Predicated region
      $region29: #{tpu_custom_call.1} parent=5 // pred_check
        _
      $region30: #{tpu_custom_call.1} parent=5 // pred_check_branch
        %200 = sbr.rel (%p197) target = $region32
      $region31: #{tpu_custom_call.1} parent=5 // pred_region
        %s201 = ssub.s32 %s21, 1
        %s202 = sand.u32 %s34, 1
        %s203 = scalar_lea.sflag [#allocation4], %s202
        %s204 = sand.u32 %s34, 1
        %s205 = smul.addr %s204, 16
        %s206 = scalar_lea.vmem [#allocation3], %s205
        // Predicated region
        $region33: #{tpu_custom_call.1} parent=31 // pred_check
          %p207 = pneg %p47
        $region34: #{tpu_custom_call.1} parent=31 // pred_check_branch
          %209 = sbr.rel (%p207) target = $region36
        $region35: #{tpu_custom_call.1} parent=31 // pred_region
          %210 = dma.done %s203, 256
        $region36: #{tpu_custom_call.1} parent=31 // pred_fallthru
          _
        // Predicated region
        $region37: #{tpu_custom_call.1} parent=31 // pred_check
          %p211 = pneg %p68
        $region38: #{tpu_custom_call.1} parent=31 // pred_check_branch
          %213 = sbr.rel (%p211) target = $region40
        $region39: #{tpu_custom_call.1} parent=31 // pred_region
          %214 = dma.done [#allocation7], 128
        $region40: #{tpu_custom_call.1} parent=31 // pred_fallthru
          _
        %s215 = sand.u32 %s34, 1
        %s216 = scalar_lea.sflag [#allocation4], %s215
        %s217 = sand.u32 %s34, 1
        %s218 = smul.addr %s217, 16
        %s219 = scalar_lea.vmem [#allocation3], %s218
        %p220 = pneg %p47
        %p221 = pneg %p44
        %p222 = pneg %p68
        %p223 = pneg %p65
        %p224 = pneg %p89
        %p225 = pneg %p86
        %p226 = pneg %p115
        %p227 = pneg %p112
        %s228 = sand.u32 %s102, 1
        %s229 = scalar_lea.sflag [#allocation5], %s228
        %s230 = sand.u32 %s102, 1
        %s231 = smul.addr %s230, 8
        %s232 = scalar_lea.vmem [#allocation8], %s231
        %p233 = pneg %p141
        %p234 = pneg %p138
        %s235 = sand.u32 %s128, 1
        %s236 = scalar_lea.sflag [#allocation10], %s235
        %s237 = sand.u32 %s128, 1
        %s238 = smul.addr %s237, 8
        %s239 = scalar_lea.vmem [#allocation9], %s238
        %240 = vst [vmem:[#allocation2] sm:$0x3] 0.0
        %241 = vst [vmem:[#allocation2 + $0x12] sm:$0x3] 0.0
        %v242 = vld [vmem:[%s206] sm:$0xff]
        %v243 = vld [vmem:[%s206 + $0x8] sm:$0xff]
        %244 = vst [vmem:[#allocation2 + $0x2] sm:$0xff] %v242
        %245 = vst [vmem:[#allocation2 + $0xa] sm:$0xff] %v243
        %v246 = vld [vmem:[#allocation6] sm:$0x1f]
        %v247 = vld [vmem:[#allocation2] sm:$0xff]
        %v248 = vld [vmem:[#allocation2 + $0x8] sm:$0xff]
        %v249 = vlaneseq
        %v250 = vshrl.u32 %v249, 7
        %v251 = vsub.s32 0, %v250
        %v252 = vrot.slane %v246, %v251
        %v253 = vmul.f32 %v252, %v247
        %v254 = vmul.f32 %v252, %v248
        %v255 = vld [vmem:[#allocation2 + $0x1] sm:$0xff]
        %v256 = vld [vmem:[#allocation2 + $0x9] sm:$0xff]
        %v257 = vlaneseq
        %v258 = vshrl.u32 %v257, 7
        %v259 = vsub.s32 1, %v258
        %v260 = vrot.slane %v246, %v259
        %v261 = vmul.f32 %v260, %v255
        %v262 = vmul.f32 %v260, %v256
        %v263 = vadd.f32 %v253, %v261
        %v264 = vadd.f32 %v254, %v262
        %v265 = vld [vmem:[#allocation2 + $0x2] sm:$0xff]
        %v266 = vld [vmem:[#allocation2 + $0xa] sm:$0xff]
        %v267 = vlaneseq
        %v268 = vshrl.u32 %v267, 7
        %v269 = vsub.s32 2, %v268
        %v270 = vrot.slane %v246, %v269
        %v271 = vmul.f32 %v270, %v265
        %v272 = vmul.f32 %v270, %v266
        %v273 = vadd.f32 %v263, %v271
        %v274 = vadd.f32 %v264, %v272
        %v275 = vld [vmem:[#allocation2 + $0x3] sm:$0xff]
        %v276 = vld [vmem:[#allocation2 + $0xb] sm:$0xff]
        %v277 = vlaneseq
        %v278 = vshrl.u32 %v277, 7
        %v279 = vsub.s32 3, %v278
        %v280 = vrot.slane %v246, %v279
        %v281 = vmul.f32 %v280, %v275
        %v282 = vmul.f32 %v280, %v276
        %v283 = vadd.f32 %v273, %v281
        %v284 = vadd.f32 %v274, %v282
        %v285 = vld [vmem:[#allocation2 + $0x4] sm:$0xff]
        %v286 = vld [vmem:[#allocation2 + $0xc] sm:$0xff]
        %v287 = vlaneseq
        %v288 = vshrl.u32 %v287, 7
        %v289 = vsub.s32 4, %v288
        %v290 = vrot.slane %v246, %v289
        %v291 = vmul.f32 %v290, %v285
        %v292 = vmul.f32 %v290, %v286
        %v293 = vadd.f32 %v283, %v291
        %v294 = vadd.f32 %v284, %v292
        %v295 = vld [vmem:[%s2] sm:$0x1]
        %v297 = vlaneseq
        %v298 = vshrl.u32 %v297, 7
        %v299 = vsub.s32 0, %v298
        %v300 = vrot.slane %v295, %v299
        %v302 = vadd.f32 %v293, %v300
        %v303 = vadd.f32 %v294, %v300
        %v304 = vpack.c.bf16 %v303, %v302
        %v306 = vunpack.c.l.b16 %v304
        %v307 = vunpack.c.h.b16 %v304
        %v308 = vpack.c.b16 %v306, %v306
        %v309 = vpack.c.b16 %v307, %v307
        %312 = vst [vmem:[%s232] sm:$0xf] %v308
        %313 = vst [vmem:[%s232 + $0x4] sm:$0xf] %v309
        %v314 = vadd.f32 %v302, %v303
        %v315 = vrot.slane %v314, 4
        %v316 = vadd.f32 %v314, %v315
        %v317 = vrot.slane %v316, 2
        %v318 = vadd.f32 %v316, %v317
        %v319 = vrot.slane %v318, 1
        %v320 = vadd.f32 %v318, %v319
        %v321 = vmul.f32 %v320, 0.0625
        %v322 = vsub.f32 %v302, %v321
        %v323 = vsub.f32 %v303, %v321
        %v324 = vmul.f32 %v322, %v322
        %v325 = vmul.f32 %v323, %v323
        %v326 = vadd.f32 %v324, %v325
        %v327 = vrot.slane %v326, 4
        %v328 = vadd.f32 %v326, %v327
        %v329 = vrot.slane %v328, 2
        %v330 = vadd.f32 %v328, %v329
        %v331 = vrot.slane %v330, 1
        %v332 = vadd.f32 %v330, %v331
        %vm333 = vcmask 1040384
        %v334 = vsel %vm333, %v320, %v332
        %vm335 = vcmask 1041408
        %v336 = vsel %vm335, %v334, 0.0
        %337 = vst [vmem:[%s239] sm:$0xff] %v336
        %s338 = sand.u32 %s102, 1
        %s339 = scalar_lea.sflag [#allocation5], %s338
        %s340 = sand.u32 %s102, 1
        %s341 = smul.addr %s340, 8
        %s342 = scalar_lea.vmem [#allocation8], %s341
        %s343 = sand.u32 %s128, 1
        %s344 = scalar_lea.sflag [#allocation10], %s343
        %s345 = sand.u32 %s128, 1
        %s346 = smul.addr %s345, 8
        %s347 = scalar_lea.vmem [#allocation9], %s346
        // Predicated region
        $region41: #{tpu_custom_call.1} parent=31 // pred_check
          %p348 = pneg %p112
        $region42: #{tpu_custom_call.1} parent=31 // pred_check_branch
          %350 = sbr.rel (%p348) target = $region44
        $region43: #{tpu_custom_call.1} parent=31 // pred_region
          %s352 = ssub.s32 128, 128
          %353 = vsyncadd %s339, %s352
          %s354 = smul.addr %s26, 2
          %s355 = smul.addr %s354, 64
          %s356 = scalar_lea.hbm %s3, %s355
          %s357 = sshll.u32 %s342, 4
          %s358 = int_to_ptr.vmem [resolvable:$true] %s357
          %363 = dma.vmem_to_hbm [thread:$0]  %s358, 128, %s356, %s339, 64, 64, 4
        $region44: #{tpu_custom_call.1} parent=31 // pred_fallthru
          _
        // Predicated region
        $region45: #{tpu_custom_call.1} parent=31 // pred_check
          %p364 = pneg %p138
        $region46: #{tpu_custom_call.1} parent=31 // pred_check_branch
          %366 = sbr.rel (%p364) target = $region48
        $region47: #{tpu_custom_call.1} parent=31 // pred_region
          %s368 = ssub.s32 128, 128
          %369 = vsyncadd %s344, %s368
          %s370 = smul.addr %s26, 128
          %s371 = scalar_lea.hbm %s4, %s370
          %s373 = sshll.u32 %s347, 4
          %s374 = int_to_ptr.vmem [resolvable:$true] %s373
          %376 = dma.vmem_to_hbm [thread:$0]  %s374, 128, %s371, %s344
        $region48: #{tpu_custom_call.1} parent=31 // pred_fallthru
          _
      $region32: #{tpu_custom_call.1} parent=5 // pred_fallthru
        _
      %p377 = scmp.le.s32.totalorder 2, %s21
      // Predicated region
      $region49: #{tpu_custom_call.1} parent=5 // pred_check
        %p378 = pneg %p377
      $region50: #{tpu_custom_call.1} parent=5 // pred_check_branch
        %380 = sbr.rel (%p378) target = $region52
      $region51: #{tpu_custom_call.1} parent=5 // pred_region
        %s381 = ssub.s32 %s21, 2
        // Predicated region
        $region53: #{tpu_custom_call.1} parent=51 // pred_check
          %p382 = pneg %p118
        $region54: #{tpu_custom_call.1} parent=51 // pred_check_branch
          %384 = sbr.rel (%p382) target = $region56
        $region55: #{tpu_custom_call.1} parent=51 // pred_region
          %s385 = sand.u32 %s103, 1
          %s386 = scalar_lea.sflag [#allocation5], %s385
          %s387 = sand.u32 %s103, 1
          %s388 = smul.addr %s387, 8
          %s389 = scalar_lea.vmem [#allocation8], %s388
          %390 = dma.done %s386, 128
        $region56: #{tpu_custom_call.1} parent=51 // pred_fallthru
          _
        // Predicated region
        $region57: #{tpu_custom_call.1} parent=51 // pred_check
          %p391 = pneg %p144
        $region58: #{tpu_custom_call.1} parent=51 // pred_check_branch
          %393 = sbr.rel (%p391) target = $region60
        $region59: #{tpu_custom_call.1} parent=51 // pred_region
          %s394 = sand.u32 %s129, 1
          %s395 = scalar_lea.sflag [#allocation10], %s394
          %s396 = sand.u32 %s129, 1
          %s397 = smul.addr %s396, 8
          %s398 = scalar_lea.vmem [#allocation9], %s397
          %399 = dma.done %s395, 128
        $region60: #{tpu_custom_call.1} parent=51 // pred_fallthru
          _
      $region52: #{tpu_custom_call.1} parent=5 // pred_fallthru
        _
    $region6: #{tpu_custom_call.1} parent=1 // loop_footer
      %s25 = sadd.s32 1, %s21
    $region7: #{tpu_custom_call.1} parent=1 // loop_footer_branch
      %20 = sbr.rel target = $region3
    $region8: #{tpu_custom_call.1} parent=1 // loop_exit
      _
    %400 = vsyncpa [#allocation4], 1
    %s401 = scalar_lea.sflag [#allocation4], 1
    %402 = vsyncpa %s401, 1
    %403 = vsyncpa [#allocation7], 1
    %404 = vsyncpa [#allocation5], 1
    %s405 = scalar_lea.sflag [#allocation5], 1
    %406 = vsyncpa %s405, 1
    %407 = vsyncpa [#allocation10], 1
    %s408 = scalar_lea.sflag [#allocation10], 1
    %409 = vsyncpa %s408, 1

</llo_original>
